<compile_context>
chip_gen: v5e
topology: v5e:2x2
jax: 0.10.0
libtpu: 0.0.40
codegen_flags: <defaults>
</compile_context>

<pallas_src>
import jax
import jax.numpy as jnp
import numpy as np
from jax.experimental import pallas as pl
from jax.experimental.pallas import tpu as pltpu

EPS = 1e-5  # nn.BatchNorm2d default


def _tap_matrices(w, W):
    """Fold the 3 dx taps (+ the conv's zero W-padding) of a 3x3 HWIO kernel into
    one banded (W*Cin, W*Cout) matrix per dy tap (host-side numpy, built once)."""
    w = np.asarray(w, np.float32)
    _, _, cin, cout = w.shape
    mats = []
    for dy in range(3):
        m = np.zeros((W * cin, W * cout), np.float32)
        for dx in range(3):
            # S[x_in, x_out] = 1 iff x_in == x_out + dx - 1; taps outside [0, W)
            # fall off the band, which IS the zero W-padding.
            s = np.eye(W, W, k=1 - dx, dtype=np.float32)
            m += np.kron(s, w[dy, dx])
        mats.append(m)
    return mats


def _super_tap_matrix(w, W, C):
    """(L, 3L) matrix [A | B | C] acting on 128-lane super-rows (2 H rows each):

        out_super[r] = x_super[r-1] @ A + x_super[r] @ B + x_super[r+1] @ C
    """
    WC = W * C
    L = 2 * WC
    w0, w1, w2 = _tap_matrices(w, W)            # dy = 0, 1, 2
    a = np.zeros((L, L), np.float32)
    a[WC:, :WC] = w0                            # x[2r-1] -> out[2r]   (dy=0 halo term)
    b = np.zeros((L, L), np.float32)
    b[:WC, :WC] = w1; b[:WC, WC:] = w0          # x[2r]   -> out[2r], out[2r+1]
    b[WC:, :WC] = w2; b[WC:, WC:] = w1          # x[2r+1] -> out[2r], out[2r+1]
    c = np.zeros((L, L), np.float32)
    c[:WC, WC:] = w2                            # x[2r+2] -> out[2r+1] (dy=2 halo term)
    return np.concatenate([a, b, c], axis=1)    # (L, 3L)


def prepare_basic_block_params(w1, w2, g1, b1, g2, b2, *, W):
    """One-time, host-side construction of the constant kernel operands
    (hoisted out of the per-call path; conv weights enter the MXU as bf16)."""
    C = np.asarray(w1).shape[2]
    two_w = 2 * W
    m1 = jnp.asarray(_super_tap_matrix(w1, W, C), jnp.bfloat16)   # (L, 3L)
    m2 = jnp.asarray(_super_tap_matrix(w2, W, C), jnp.bfloat16)   # (L, 3L)
    # Channel reduce + broadcast: (v @ R)[g*C + c] = sum_g' v[g'*C + c].
    # TODO(synk): at real shapes (W=56, C=64) factor R as (L,C)@(C,L) (or strided
    #             roll-adds) so it does not occupy O(L^2) VMEM on v7x's 64 MiB;
    #             here the dense form is only 64 KiB.
    r_full = jnp.asarray(np.kron(np.ones((two_w, two_w), np.float32),
                                 np.eye(C, dtype=np.float32)))    # (L, L) f32
    gb = jnp.asarray(np.stack([np.tile(np.asarray(g1, np.float32), two_w),
                               np.tile(np.asarray(b1, np.float32), two_w),
                               np.tile(np.asarray(g2, np.float32), two_w),
                               np.tile(np.asarray(b2, np.float32), two_w)]))  # (4, L)
    return {"m1": m1, "m2": m2, "r": r_full, "gb": gb}


def basic_block_pallas(x_nhwc, params):
    """x_nhwc: (N, H, W, C) f32; params from prepare_basic_block_params."""
    N, H, W, C = x_nhwc.shape
    assert H % 2 == 0, "two H rows are folded per slab row"
    Hs = H // 2                        # super-rows per image
    R = N * Hs                         # slab rows
    L = 2 * W * C                      # lanes (128 here)
    inv_count = 1.0 / float(N * H * W)

    # lane-dense activation slab; pure reshape (memory order already n,h,w,c)
    x_slab = x_nhwc.reshape(R, L)

    def kernel(x_ref, m1_ref, m2_ref, r_ref, gb_ref, out_ref):
        # per-image boundary masks for the +-1 super-row couplings (VPU, computed once)
        row = jax.lax.broadcasted_iota(jnp.int32, (R, L), 0)
        not_first = (row % Hs) != 0
        not_last = (row % Hs) != (Hs - 1)

        def conv3x3(x_bf16, m_ref):
            # one wide bf16 MXU matmul over all three dy taps, f32 accumulation
            t = jnp.dot(x_bf16, m_ref[...], preferred_element_type=jnp.float32)  # (R, 3L)
            t_up, t_mid, t_dn = t[:, :L], t[:, L:2 * L], t[:, 2 * L:]
            # +-1 super-row couplings: sublane roll (XLU) + zero the per-image halo rows
            from_above = jnp.where(not_first, pltpu.roll(t_up, shift=1, axis=0), 0.0)
            from_below = jnp.where(not_last, pltpu.roll(t_dn, shift=R - 1, axis=0), 0.0)
            return t_mid + from_above + from_below

        def batchnorm(acc, gamma, beta):
            # training-mode batch stats: rows reduced first (XLU), then a single tiny
            # (2, L) @ (L, L) matmul does the per-channel reduce + lane broadcast.
            rsum = jnp.sum(acc, axis=0, keepdims=True)
            rsq = jnp.sum(acc * acc, axis=0, keepdims=True)
            red = jnp.dot(jnp.concatenate([rsum, rsq], axis=0), r_ref[...],
                          preferred_element_type=jnp.float32)        # (2, L)
            mean = red[0:1, :] * inv_count
            var = jnp.maximum(red[1:2, :] * inv_count - mean * mean, 0.0)
            scale = gamma * jax.lax.rsqrt(var + EPS)
            shift = beta - mean * scale
            return acc * scale + shift

        x_f32 = x_ref[...]                                    # residual kept in f32
        acc1 = conv3x3(x_f32.astype(jnp.bfloat16), m1_ref)
        y1 = jnp.maximum(batchnorm(acc1, gb_ref[0:1, :], gb_ref[1:2, :]), 0.0)
        acc2 = conv3x3(y1.astype(jnp.bfloat16), m2_ref)
        y2 = batchnorm(acc2, gb_ref[2:3, :], gb_ref[3:4, :])
        out_ref[...] = jnp.maximum(y2 + x_f32, 0.0)           # full-width 128-lane store

    # TODO(synk): at real ResNet shapes (C>=64, H=W=56, large N) add a grid over the
    #             slab-row axis ("parallel" for v7x's 2 TCs, ~512-row tiles, halo-aware
    #             rolls at tile edges) with pl.when-initialized cross-tile sum/sumsq
    #             scratch (or a 2-pass split) since BN stats are global; budget tiles +
    #             resident tap/R matrices <= ~48 MiB scoped VMEM on v7x (64 MiB
    #             physical) and larger tiles on v5e/v6e (128 MiB). At this toy size the
    #             whole problem is a single VMEM block.
    out = pl.pallas_call(
        kernel,
        out_shape=jax.ShapeDtypeStruct((R, L), jnp.float32),
        in_specs=[pl.BlockSpec(memory_space=pltpu.MemorySpace.VMEM)] * 5,
        out_specs=pl.BlockSpec(memory_space=pltpu.MemorySpace.VMEM),
        compiler_params=pltpu.CompilerParams(vmem_limit_bytes=32 * 1024 * 1024),
    )(x_slab, params["m1"], params["m2"], params["r"], params["gb"])
    return out.reshape(N, H, W, C)


def basic_block_reference(x_nhwc, w1, w2, g1, b1, g2, b2):
    """Pure-JAX f32 reference (training-mode BN), for correctness checking."""
    def conv(inp, w):
        return jax.lax.conv_general_dilated(
            inp, w, window_strides=(1, 1), padding=((1, 1), (1, 1)),
            dimension_numbers=("NHWC", "HWIO", "NHWC"))

    def bn(z, g, b):
        m = jnp.mean(z, axis=(0, 1, 2), keepdims=True)
        v = jnp.mean((z - m) ** 2, axis=(0, 1, 2), keepdims=True)
        return (z - m) * jax.lax.rsqrt(v + EPS) * g.reshape(1, 1, 1, -1) \
            + b.reshape(1, 1, 1, -1)

    out = jnp.maximum(bn(conv(x_nhwc, w1), g1, b1), 0.0)
    out = bn(conv(out, w2), g2, b2)
    return jnp.maximum(out + x_nhwc, 0.0)


if __name__ == "__main__":
    # BasicBlock(in_channel=4, out_channel=4, stride=1, downsample=None)
    N, C, H, W = 2, 4, 16, 16

    key = jax.random.PRNGKey(0)
    k_x, k_w1, k_w2 = jax.random.split(key, 3)

    x_nchw = jax.random.normal(k_x, (N, C, H, W), jnp.float32)   # PyTorch-style input
    x_nhwc = jnp.transpose(x_nchw, (0, 2, 3, 1))                 # kernel layout

    # conv weights (HWIO), deterministic init
    w1 = jax.random.normal(k_w1, (3, 3, C, C), jnp.float32) * 0.1
    w2 = jax.random.normal(k_w2, (3, 3, C, C), jnp.float32) * 0.1
    # BatchNorm2d default init: weight=1, bias=0
    g1 = jnp.ones((C,), jnp.float32); b1 = jnp.zeros((C,), jnp.float32)
    g2 = jnp.ones((C,), jnp.float32); b2 = jnp.zeros((C,), jnp.float32)

    params = prepare_basic_block_params(w1, w2, g1, b1, g2, b2, W=W)  # built once

    out = basic_block_pallas(x_nhwc, params)
    out = jax.block_until_ready(out)

    ref = basic_block_reference(x_nhwc, w1, w2, g1, b1, g2, b2)
    # tolerance reflects bf16 MXU operands (f32 accumulation, f32 BN/residual math)
    np.testing.assert_allclose(np.asarray(out), np.asarray(ref), rtol=5e-2, atol=5e-2)

    print("KERNEL_OK")
</pallas_src>

<mosaic_0001>
module attributes {stable_mosaic.version = 11 : i64} {
  func.func @kernel(%arg0: memref<16x128xf32, #tpu.memory_space<vmem>>, %arg1: memref<128x384xbf16, #tpu.memory_space<vmem>>, %arg2: memref<128x384xbf16, #tpu.memory_space<vmem>>, %arg3: memref<128x128xf32, #tpu.memory_space<vmem>>, %arg4: memref<4x128xf32, #tpu.memory_space<vmem>>, %arg5: memref<16x128xf32, #tpu.memory_space<vmem>>) attributes {dimension_semantics = [], scalar_prefetch = 0 : i64, scratch_operands = 0 : i64, tpu.core_type = #tpu.core_type<tc>} {
    %0 = tpu.iota {dimensions = array<i32: 0>} : vector<16x128xi32>
    %c8_i32 = arith.constant 8 : i32
    %c0_i32 = arith.constant 0 : i32
    %1 = arith.cmpi eq, %c8_i32, %c0_i32 : i32
    %c1_i32 = arith.constant 1 : i32
    %2 = arith.select %1, %c1_i32, %c8_i32 : i32
    %3 = vector.broadcast %2 : i32 to vector<16x128xi32>
    %4 = arith.remsi %0, %3 : vector<16x128xi32>
    %c0_i32_0 = arith.constant 0 : i32
    %5 = vector.broadcast %c0_i32_0 : i32 to vector<16x128xi32>
    %6 = arith.cmpi ne, %4, %5 : vector<16x128xi32>
    %c0_i32_1 = arith.constant 0 : i32
    %7 = vector.broadcast %c0_i32_1 : i32 to vector<16x128xi32>
    %8 = arith.cmpi slt, %4, %7 : vector<16x128xi32>
    %c0_i32_2 = arith.constant 0 : i32
    %9 = arith.cmpi slt, %2, %c0_i32_2 : i32
    %10 = vector.broadcast %9 : i1 to vector<16x128xi1>
    %11 = vector.broadcast %10 : vector<16x128xi1> to vector<16x128xi1>
    %12 = arith.xori %8, %11 : vector<16x128xi1>
    %13 = arith.andi %12, %6 : vector<16x128xi1>
    %14 = vector.broadcast %2 : i32 to vector<16x128xi32>
    %15 = arith.addi %4, %14 : vector<16x128xi32>
    %16 = arith.select %13, %15, %4 : vector<16x128xi1>, vector<16x128xi32>
    %c0_i32_3 = arith.constant 0 : i32
    %17 = vector.broadcast %c0_i32_3 : i32 to vector<16x128xi32>
    %18 = arith.cmpi ne, %16, %17 : vector<16x128xi32>
    %c8_i32_4 = arith.constant 8 : i32
    %c0_i32_5 = arith.constant 0 : i32
    %19 = arith.cmpi eq, %c8_i32_4, %c0_i32_5 : i32
    %c1_i32_6 = arith.constant 1 : i32
    %20 = arith.select %19, %c1_i32_6, %c8_i32_4 : i32
    %21 = vector.broadcast %20 : i32 to vector<16x128xi32>
    %22 = arith.remsi %0, %21 : vector<16x128xi32>
    %c0_i32_7 = arith.constant 0 : i32
    %23 = vector.broadcast %c0_i32_7 : i32 to vector<16x128xi32>
    %24 = arith.cmpi ne, %22, %23 : vector<16x128xi32>
    %c0_i32_8 = arith.constant 0 : i32
    %25 = vector.broadcast %c0_i32_8 : i32 to vector<16x128xi32>
    %26 = arith.cmpi slt, %22, %25 : vector<16x128xi32>
    %c0_i32_9 = arith.constant 0 : i32
    %27 = arith.cmpi slt, %20, %c0_i32_9 : i32
    %28 = vector.broadcast %27 : i1 to vector<16x128xi1>
    %29 = vector.broadcast %28 : vector<16x128xi1> to vector<16x128xi1>
    %30 = arith.xori %26, %29 : vector<16x128xi1>
    %31 = arith.andi %30, %24 : vector<16x128xi1>
    %32 = vector.broadcast %20 : i32 to vector<16x128xi32>
    %33 = arith.addi %22, %32 : vector<16x128xi32>
    %34 = arith.select %31, %33, %22 : vector<16x128xi1>, vector<16x128xi32>
    %c7_i32 = arith.constant 7 : i32
    %35 = vector.broadcast %c7_i32 : i32 to vector<16x128xi32>
    %36 = arith.cmpi ne, %34, %35 : vector<16x128xi32>
    %c0 = arith.constant 0 : index
    %c0_10 = arith.constant 0 : index
    %37 = vector.load %arg0[%c0, %c0_10] : memref<16x128xf32, #tpu.memory_space<vmem>>, vector<16x128xf32>
    %38 = arith.truncf %37 : vector<16x128xf32> to vector<16x128xbf16>
    %c0_11 = arith.constant 0 : index
    %c0_12 = arith.constant 0 : index
    %39 = vector.load %arg1[%c0_11, %c0_12] : memref<128x384xbf16, #tpu.memory_space<vmem>>, vector<128x384xbf16>
    %cst = arith.constant dense<0.000000e+00> : vector<16x384xf32>
    %40 = tpu.matmul %38, %39, %cst {dimension_numbers = #tpu.dot_dimension_numbers<[1], [0], [0], [1], [0, 0, 1, 1], [], []>} : vector<16x128xbf16>, vector<128x384xbf16>, vector<16x384xf32> -> vector<16x384xf32>
    %41 = vector.extract_strided_slice %40 {offsets = [0, 0], sizes = [16, 128], strides = [1, 1]} : vector<16x384xf32> to vector<16x128xf32>
    %42 = vector.extract_strided_slice %40 {offsets = [0, 128], sizes = [16, 128], strides = [1, 1]} : vector<16x384xf32> to vector<16x128xf32>
    %43 = vector.extract_strided_slice %40 {offsets = [0, 256], sizes = [16, 128], strides = [1, 1]} : vector<16x384xf32> to vector<16x128xf32>
    %c1_i32_13 = arith.constant 1 : i32
    %44 = tpu.dynamic_rotate %41 by %c1_i32_13 dim 0 : vector<16x128xf32>, i32 -> vector<16x128xf32>
    %cst_14 = arith.constant 0.000000e+00 : f32
    %45 = vector.broadcast %cst_14 : f32 to vector<16x128xf32>
    %46 = arith.select %18, %44, %45 : vector<16x128xi1>, vector<16x128xf32>
    %c15_i32 = arith.constant 15 : i32
    %47 = tpu.dynamic_rotate %43 by %c15_i32 dim 0 : vector<16x128xf32>, i32 -> vector<16x128xf32>
    %cst_15 = arith.constant 0.000000e+00 : f32
    %48 = vector.broadcast %cst_15 : f32 to vector<16x128xf32>
    %49 = arith.select %36, %47, %48 : vector<16x128xi1>, vector<16x128xf32>
    %50 = arith.addf %42, %46 : vector<16x128xf32>
    %51 = arith.addf %50, %49 : vector<16x128xf32>
    %c0_16 = arith.constant 0 : index
    %c0_17 = arith.constant 0 : index
    %52 = vector.load %arg4[%c0_16, %c0_17] : memref<4x128xf32, #tpu.memory_space<vmem>>, vector<1x128xf32>
    %c1 = arith.constant 1 : index
    %c0_18 = arith.constant 0 : index
    %53 = vector.load %arg4[%c1, %c0_18] : memref<4x128xf32, #tpu.memory_space<vmem>>, vector<1x128xf32>
    %cst_19 = arith.constant dense<0.000000e+00> : vector<128xf32>
    %54 = vector.multi_reduction <add>, %51, %cst_19 [0] : vector<16x128xf32> to vector<128xf32>
    %55 = vector.shape_cast %54 : vector<128xf32> to vector<1x128xf32>
    %56 = arith.mulf %51, %51 : vector<16x128xf32>
    %cst_20 = arith.constant dense<0.000000e+00> : vector<128xf32>
    %57 = vector.multi_reduction <add>, %56, %cst_20 [0] : vector<16x128xf32> to vector<128xf32>
    %58 = vector.shape_cast %57 : vector<128xf32> to vector<1x128xf32>
    %59 = tpu.concatenate %55, %58 in 0 : vector<1x128xf32>, vector<1x128xf32> -> vector<2x128xf32>
    %c0_21 = arith.constant 0 : index
    %c0_22 = arith.constant 0 : index
    %60 = vector.load %arg3[%c0_21, %c0_22] : memref<128x128xf32, #tpu.memory_space<vmem>>, vector<128x128xf32>
    %cst_23 = arith.constant dense<0.000000e+00> : vector<2x128xf32>
    %61 = tpu.matmul %59, %60, %cst_23 {dimension_numbers = #tpu.dot_dimension_numbers<[1], [0], [0], [1], [0, 0, 1, 1], [], []>} : vector<2x128xf32>, vector<128x128xf32>, vector<2x128xf32> -> vector<2x128xf32>
    %62 = vector.extract_strided_slice %61 {offsets = [0, 0], sizes = [1, 128], strides = [1, 1]} : vector<2x128xf32> to vector<1x128xf32>
    %cst_24 = arith.constant 0.001953125 : f32
    %63 = vector.broadcast %cst_24 : f32 to vector<1x128xf32>
    %64 = arith.mulf %62, %63 : vector<1x128xf32>
    %65 = vector.extract_strided_slice %61 {offsets = [1, 0], sizes = [1, 128], strides = [1, 1]} : vector<2x128xf32> to vector<1x128xf32>
    %cst_25 = arith.constant 0.001953125 : f32
    %66 = vector.broadcast %cst_25 : f32 to vector<1x128xf32>
    %67 = arith.mulf %65, %66 : vector<1x128xf32>
    %68 = arith.mulf %64, %64 : vector<1x128xf32>
    %69 = arith.subf %67, %68 : vector<1x128xf32>
    %cst_26 = arith.constant 0.000000e+00 : f32
    %70 = vector.broadcast %cst_26 : f32 to vector<1x128xf32>
    %71 = arith.maximumf %69, %70 : vector<1x128xf32>
    %cst_27 = arith.constant 9.99999974E-6 : f32
    %72 = vector.broadcast %cst_27 : f32 to vector<1x128xf32>
    %73 = arith.addf %71, %72 : vector<1x128xf32>
    %74 = math.rsqrt %73 : vector<1x128xf32>
    %75 = arith.mulf %52, %74 : vector<1x128xf32>
    %76 = arith.mulf %64, %75 : vector<1x128xf32>
    %77 = arith.subf %53, %76 : vector<1x128xf32>
    %78 = vector.broadcast %75 : vector<1x128xf32> to vector<16x128xf32>
    %79 = arith.mulf %51, %78 : vector<16x128xf32>
    %80 = vector.broadcast %77 : vector<1x128xf32> to vector<16x128xf32>
    %81 = arith.addf %79, %80 : vector<16x128xf32>
    %cst_28 = arith.constant 0.000000e+00 : f32
    %82 = vector.broadcast %cst_28 : f32 to vector<16x128xf32>
    %83 = arith.maximumf %81, %82 : vector<16x128xf32>
    %84 = arith.truncf %83 : vector<16x128xf32> to vector<16x128xbf16>
    %c0_29 = arith.constant 0 : index
    %c0_30 = arith.constant 0 : index
    %85 = vector.load %arg2[%c0_29, %c0_30] : memref<128x384xbf16, #tpu.memory_space<vmem>>, vector<128x384xbf16>
    %cst_31 = arith.constant dense<0.000000e+00> : vector<16x384xf32>
    %86 = tpu.matmul %84, %85, %cst_31 {dimension_numbers = #tpu.dot_dimension_numbers<[1], [0], [0], [1], [0, 0, 1, 1], [], []>} : vector<16x128xbf16>, vector<128x384xbf16>, vector<16x384xf32> -> vector<16x384xf32>
    %87 = vector.extract_strided_slice %86 {offsets = [0, 0], sizes = [16, 128], strides = [1, 1]} : vector<16x384xf32> to vector<16x128xf32>
    %88 = vector.extract_strided_slice %86 {offsets = [0, 128], sizes = [16, 128], strides = [1, 1]} : vector<16x384xf32> to vector<16x128xf32>
    %89 = vector.extract_strided_slice %86 {offsets = [0, 256], sizes = [16, 128], strides = [1, 1]} : vector<16x384xf32> to vector<16x128xf32>
    %c1_i32_32 = arith.constant 1 : i32
    %90 = tpu.dynamic_rotate %87 by %c1_i32_32 dim 0 : vector<16x128xf32>, i32 -> vector<16x128xf32>
    %cst_33 = arith.constant 0.000000e+00 : f32
    %91 = vector.broadcast %cst_33 : f32 to vector<16x128xf32>
    %92 = arith.select %18, %90, %91 : vector<16x128xi1>, vector<16x128xf32>
    %c15_i32_34 = arith.constant 15 : i32
    %93 = tpu.dynamic_rotate %89 by %c15_i32_34 dim 0 : vector<16x128xf32>, i32 -> vector<16x128xf32>
    %cst_35 = arith.constant 0.000000e+00 : f32
    %94 = vector.broadcast %cst_35 : f32 to vector<16x128xf32>
    %95 = arith.select %36, %93, %94 : vector<16x128xi1>, vector<16x128xf32>
    %96 = arith.addf %88, %92 : vector<16x128xf32>
    %97 = arith.addf %96, %95 : vector<16x128xf32>
    %c2 = arith.constant 2 : index
    %c0_36 = arith.constant 0 : index
    %98 = vector.load %arg4[%c2, %c0_36] : memref<4x128xf32, #tpu.memory_space<vmem>>, vector<1x128xf32>
    %c3 = arith.constant 3 : index
    %c0_37 = arith.constant 0 : index
    %99 = vector.load %arg4[%c3, %c0_37] : memref<4x128xf32, #tpu.memory_space<vmem>>, vector<1x128xf32>
    %cst_38 = arith.constant dense<0.000000e+00> : vector<128xf32>
    %100 = vector.multi_reduction <add>, %97, %cst_38 [0] : vector<16x128xf32> to vector<128xf32>
    %101 = vector.shape_cast %100 : vector<128xf32> to vector<1x128xf32>
    %102 = arith.mulf %97, %97 : vector<16x128xf32>
    %cst_39 = arith.constant dense<0.000000e+00> : vector<128xf32>
    %103 = vector.multi_reduction <add>, %102, %cst_39 [0] : vector<16x128xf32> to vector<128xf32>
    %104 = vector.shape_cast %103 : vector<128xf32> to vector<1x128xf32>
    %105 = tpu.concatenate %101, %104 in 0 : vector<1x128xf32>, vector<1x128xf32> -> vector<2x128xf32>
    %c0_40 = arith.constant 0 : index
    %c0_41 = arith.constant 0 : index
    %106 = vector.load %arg3[%c0_40, %c0_41] : memref<128x128xf32, #tpu.memory_space<vmem>>, vector<128x128xf32>
    %cst_42 = arith.constant dense<0.000000e+00> : vector<2x128xf32>
    %107 = tpu.matmul %105, %106, %cst_42 {dimension_numbers = #tpu.dot_dimension_numbers<[1], [0], [0], [1], [0, 0, 1, 1], [], []>} : vector<2x128xf32>, vector<128x128xf32>, vector<2x128xf32> -> vector<2x128xf32>
    %108 = vector.extract_strided_slice %107 {offsets = [0, 0], sizes = [1, 128], strides = [1, 1]} : vector<2x128xf32> to vector<1x128xf32>
    %cst_43 = arith.constant 0.001953125 : f32
    %109 = vector.broadcast %cst_43 : f32 to vector<1x128xf32>
    %110 = arith.mulf %108, %109 : vector<1x128xf32>
    %111 = vector.extract_strided_slice %107 {offsets = [1, 0], sizes = [1, 128], strides = [1, 1]} : vector<2x128xf32> to vector<1x128xf32>
    %cst_44 = arith.constant 0.001953125 : f32
    %112 = vector.broadcast %cst_44 : f32 to vector<1x128xf32>
    %113 = arith.mulf %111, %112 : vector<1x128xf32>
    %114 = arith.mulf %110, %110 : vector<1x128xf32>
    %115 = arith.subf %113, %114 : vector<1x128xf32>
    %cst_45 = arith.constant 0.000000e+00 : f32
    %116 = vector.broadcast %cst_45 : f32 to vector<1x128xf32>
    %117 = arith.maximumf %115, %116 : vector<1x128xf32>
    %cst_46 = arith.constant 9.99999974E-6 : f32
    %118 = vector.broadcast %cst_46 : f32 to vector<1x128xf32>
    %119 = arith.addf %117, %118 : vector<1x128xf32>
    %120 = math.rsqrt %119 : vector<1x128xf32>
    %121 = arith.mulf %98, %120 : vector<1x128xf32>
    %122 = arith.mulf %110, %121 : vector<1x128xf32>
    %123 = arith.subf %99, %122 : vector<1x128xf32>
    %124 = vector.broadcast %121 : vector<1x128xf32> to vector<16x128xf32>
    %125 = arith.mulf %97, %124 : vector<16x128xf32>
    %126 = vector.broadcast %123 : vector<1x128xf32> to vector<16x128xf32>
    %127 = arith.addf %125, %126 : vector<16x128xf32>
    %128 = arith.addf %127, %37 : vector<16x128xf32>
    %cst_47 = arith.constant 0.000000e+00 : f32
    %129 = vector.broadcast %cst_47 : f32 to vector<16x128xf32>
    %130 = arith.maximumf %128, %129 : vector<16x128xf32>
    %c0_48 = arith.constant 0 : index
    %c0_49 = arith.constant 0 : index
    %131 = vector.load %arg5[%c0_48, %c0_49] : memref<16x128xf32, #tpu.memory_space<vmem>>, vector<16x128xf32>
    tpu.vector_store %arg5[%c0_48, %c0_49], %130 {strides = array<i32>} : memref<16x128xf32, #tpu.memory_space<vmem>>, vector<16x128xf32>,
    return
  }
}

</mosaic_0001>

<llo_original>
// kernel: tpu_custom_call.1
$region0: #{tpu_custom_call.1}
  #allocation0 [shape = 'u32[]', space=smem, size = 0x4, offset = 0x4, fixed_abs, tag = 'smem constant byte address 0x4 - core index']
  #allocation1 [shape = 'u32[72,128]{1,0:T(1,128)}', space=vmem, size = 0x9000, scoped, tag = 'internal scratch']
  %s0 = inlined_call_operand.hbm [shape: f32[16,128], index: 0, kind: input, shape index: {}]
  %s1 = inlined_call_operand.hbm [shape: bf16[128,384], index: 1, kind: input, shape index: {}]
  %s2 = inlined_call_operand.hbm [shape: bf16[128,384], index: 2, kind: input, shape index: {}]
  %s3 = inlined_call_operand.hbm [shape: f32[128,128], index: 3, kind: input, shape index: {}]
  %s4 = inlined_call_operand.hbm [shape: f32[4,128], index: 4, kind: input, shape index: {}]
  %s5 = inlined_call_operand.hbm [shape: f32[16,128], index: 5, kind: output, shape index: {}]
  %s6 = sld [smem:[#allocation0]]
  $region50: #{tpu_custom_call.1} parent=0
    _
  %s8 = ssub.s32 1, %s6
  %s9 = scalar_select 0, %s8, %s6
  $region1: #{tpu_custom_call.1} parent=0
    #allocation2 [shape = 'u8[8192]{0}', space=vmem, size = 0x2000, scoped, tag = 'input window, operand 0, single buffered']
    #allocation3 [shape = 's32[1]{0}', space=sflag, size = 0x4, scoped, tag = 'scoped memory for tpu_custom_call.1']
    #allocation4 [shape = 's32[1]{0}', space=sflag, size = 0x4, scoped, tag = 'scoped memory for tpu_custom_call.1']
    #allocation5 [shape = 'u8[98304]{0}', space=vmem, size = 0x18000, scoped, tag = 'input window, operand 1, single buffered']
    #allocation6 [shape = 's32[1]{0}', space=sflag, size = 0x4, scoped, tag = 'scoped memory for tpu_custom_call.1']
    #allocation7 [shape = 'u8[98304]{0}', space=vmem, size = 0x18000, scoped, tag = 'input window, operand 2, single buffered']
    #allocation8 [shape = 'u8[65536]{0}', space=vmem, size = 0x10000, scoped, tag = 'input window, operand 3, single buffered']
    #allocation9 [shape = 's32[1]{0}', space=sflag, size = 0x4, scoped, tag = 'scoped memory for tpu_custom_call.1']
    #allocation10 [shape = 'u8[2048]{0}', space=vmem, size = 0x800, scoped, tag = 'input window, operand 4, single buffered']
    #allocation11 [shape = 'u8[8192]{0}', space=vmem, size = 0x2000, scoped, tag = 'output window, operand 0, single buffered']
    %10 = vsyncpa [#allocation3], 0
    %11 = vsyncpa [#allocation6], 0
    %12 = vsyncpa [#allocation9], 0
    %13 = vsyncpa [#allocation4], 0
    // Predicated region
    $region2: #{tpu_custom_call.1} parent=1 // pred_check
      _
    $region3: #{tpu_custom_call.1} parent=1 // pred_check_branch
      %15 = sbr.rel (0) target = $region5
    $region4: #{tpu_custom_call.1} parent=1 // pred_region
      %17 = vsyncadd [#allocation3], 0
      %s18 = sshll.u32 %s0, 4
      %s19 = int_to_ptr.hbm [resolvable:$true] %s18
      %s20 = sshll.u32 [#allocation2], 4
      %s21 = int_to_ptr.vmem [resolvable:$true] %s20
      %26 = dma.hbm_to_vmem [thread:$0]  %s19, 256, %s21, [#allocation3], 128, 128, 8
    $region5: #{tpu_custom_call.1} parent=1 // pred_fallthru
      _
    // Predicated region
    $region6: #{tpu_custom_call.1} parent=1 // pred_check
      _
    $region7: #{tpu_custom_call.1} parent=1 // pred_check_branch
      %28 = sbr.rel (0) target = $region9
    $region8: #{tpu_custom_call.1} parent=1 // pred_region
      %30 = vsyncadd [#allocation6], 0
      %s31 = sshll.u32 %s1, 4
      %s32 = int_to_ptr.hbm [resolvable:$true] %s31
      %s33 = sshll.u32 [#allocation5], 4
      %s34 = int_to_ptr.vmem [resolvable:$true] %s33
      %39 = dma.hbm_to_vmem [thread:$0]  %s32, 3072, %s34, [#allocation6], 192, 192, 12
    $region9: #{tpu_custom_call.1} parent=1 // pred_fallthru
      _
    // Predicated region
    $region10: #{tpu_custom_call.1} parent=1 // pred_check
      _
    $region11: #{tpu_custom_call.1} parent=1 // pred_check_branch
      %41 = sbr.rel (0) target = $region13
    $region12: #{tpu_custom_call.1} parent=1 // pred_region
      %43 = vsyncadd [#allocation6], 0
      %s44 = sshll.u32 %s2, 4
      %s45 = int_to_ptr.hbm [resolvable:$true] %s44
      %s46 = sshll.u32 [#allocation7], 4
      %s47 = int_to_ptr.vmem [resolvable:$true] %s46
      %52 = dma.hbm_to_vmem [thread:$0]  %s45, 3072, %s47, [#allocation6], 192, 192, 12
    $region13: #{tpu_custom_call.1} parent=1 // pred_fallthru
      _
    // Predicated region
    $region14: #{tpu_custom_call.1} parent=1 // pred_check
      _
    $region15: #{tpu_custom_call.1} parent=1 // pred_check_branch
      %54 = sbr.rel (0) target = $region17
    $region16: #{tpu_custom_call.1} parent=1 // pred_region
      %56 = vsyncadd [#allocation9], 0
      %s57 = sshll.u32 %s3, 4
      %s58 = int_to_ptr.hbm [resolvable:$true] %s57
      %s59 = sshll.u32 [#allocation8], 4
      %s60 = int_to_ptr.vmem [resolvable:$true] %s59
      %65 = dma.hbm_to_vmem [thread:$0]  %s58, 2048, %s60, [#allocation9], 128, 128, 8
    $region17: #{tpu_custom_call.1} parent=1 // pred_fallthru
      _
    // Predicated region
    $region18: #{tpu_custom_call.1} parent=1 // pred_check
      _
    $region19: #{tpu_custom_call.1} parent=1 // pred_check_branch
      %67 = sbr.rel (0) target = $region21
    $region20: #{tpu_custom_call.1} parent=1 // pred_region
      %69 = vsyncadd [#allocation9], 0
      %s71 = sshll.u32 %s4, 4
      %s72 = int_to_ptr.hbm [resolvable:$true] %s71
      %s73 = sshll.u32 [#allocation10], 4
      %s74 = int_to_ptr.vmem [resolvable:$true] %s73
      %76 = dma.hbm_to_vmem [thread:$0]  %s72, 64, %s74, [#allocation9]
    $region21: #{tpu_custom_call.1} parent=1 // pred_fallthru
      _
    // Predicated region
    $region22: #{tpu_custom_call.1} parent=1 // pred_check
      _
    $region23: #{tpu_custom_call.1} parent=1 // pred_check_branch
      %78 = sbr.rel (0) target = $region25
    $region24: #{tpu_custom_call.1} parent=1 // pred_region
      %80 = dma.done [#allocation3], 256
    $region25: #{tpu_custom_call.1} parent=1 // pred_fallthru
      _
    // Predicated region
    $region26: #{tpu_custom_call.1} parent=1 // pred_check
      _
    $region27: #{tpu_custom_call.1} parent=1 // pred_check_branch
      %82 = sbr.rel (0) target = $region29
    $region28: #{tpu_custom_call.1} parent=1 // pred_region
      %84 = dma.done [#allocation6], 3072
    $region29: #{tpu_custom_call.1} parent=1 // pred_fallthru
      _
    // Predicated region
    $region30: #{tpu_custom_call.1} parent=1 // pred_check
      _
    $region31: #{tpu_custom_call.1} parent=1 // pred_check_branch
      %86 = sbr.rel (0) target = $region33
    $region32: #{tpu_custom_call.1} parent=1 // pred_region
      %88 = dma.done [#allocation6], 3072
    $region33: #{tpu_custom_call.1} parent=1 // pred_fallthru
      _
    // Predicated region
    $region34: #{tpu_custom_call.1} parent=1 // pred_check
      _
    $region35: #{tpu_custom_call.1} parent=1 // pred_check_branch
      %90 = sbr.rel (0) target = $region37
    $region36: #{tpu_custom_call.1} parent=1 // pred_region
      %92 = dma.done [#allocation9], 2048
    $region37: #{tpu_custom_call.1} parent=1 // pred_fallthru
      _
    // Predicated region
    $region38: #{tpu_custom_call.1} parent=1 // pred_check
      _
    $region39: #{tpu_custom_call.1} parent=1 // pred_check_branch
      %94 = sbr.rel (0) target = $region41
    $region40: #{tpu_custom_call.1} parent=1 // pred_region
      %96 = dma.done [#allocation9], 64
    $region41: #{tpu_custom_call.1} parent=1 // pred_fallthru
      _
    %v97 = vlaneseq
    %v98 = vshrl.u32 %v97, 7
    %v99 = vadd.s32 %v98, 8
    %vm100 = vcmp.lt.s32.totalorder %v98, 0
    %v101 = vsub.s32 0, %v98
    %v102 = vsel %vm100, %v101, %v98
    %v103 = vshrl.u32 %v102, 3
    %v104 = vand.u32 %v102, 7
    %v105 = vsub.s32 0, %v104
    %v106 = vsel %vm100, %v105, %v104
    %vm107 = vcmp.lt.s32.totalorder %v99, 0
    %v108 = vsub.s32 0, %v99
    %v109 = vsel %vm107, %v108, %v99
    %v110 = vshrl.u32 %v109, 3
    %v111 = vand.u32 %v109, 7
    %v112 = vsub.s32 0, %v111
    %v113 = vsel %vm107, %v112, %v111
    %vm114 = vcmp.ne.s32.totalorder %v106, 0
    %vm115 = vcmp.ne.s32.totalorder %v113, 0
    %vm116 = vcmp.lt.s32.totalorder %v106, 0
    %vm117 = vcmp.lt.s32.totalorder %v113, 0
    %vm118 = vmand %vm116, %vm114
    %vm119 = vmand %vm117, %vm115
    %v120 = vadd.s32 %v106, 8
    %v121 = vadd.s32 %v113, 8
    %v122 = vsel %vm118, %v120, %v106
    %v123 = vsel %vm119, %v121, %v113
    %vm124 = vcmp.ne.s32.totalorder %v122, 0
    %vm125 = vcmp.ne.s32.totalorder %v123, 0
    %vm126 = vcmp.ne.s32.totalorder %v122, 7
    %vm127 = vcmp.ne.s32.totalorder %v123, 7
    %v128 = vld [vmem:[#allocation2] sm:$0xff]
    %v129 = vld [vmem:[#allocation2 + $0x8] sm:$0xff]
    %v130 = vpack.c.bf16 %v129, %v128
    %v131 = vld [vmem:[#allocation5] sm:$0xff]
    %v132 = vld [vmem:[#allocation5 + $0x8] sm:$0xf]
    %v133 = vld [vmem:[#allocation5 + $0xc] sm:$0xff]
    %v134 = vld [vmem:[#allocation5 + $0x14] sm:$0xf]
    %v135 = vld [vmem:[#allocation5 + $0x18] sm:$0xff]
    %v136 = vld [vmem:[#allocation5 + $0x20] sm:$0xf]
    %v137 = vld [vmem:[#allocation5 + $0x24] sm:$0xff]
    %v138 = vld [vmem:[#allocation5 + $0x2c] sm:$0xf]
    %v139 = vld [vmem:[#allocation5 + $0x30] sm:$0xff]
    %v140 = vld [vmem:[#allocation5 + $0x38] sm:$0xf]
    %v141 = vld [vmem:[#allocation5 + $0x3c] sm:$0xff]
    %v142 = vld [vmem:[#allocation5 + $0x44] sm:$0xf]
    %v143 = vld [vmem:[#allocation5 + $0x48] sm:$0xff]
    %v144 = vld [vmem:[#allocation5 + $0x50] sm:$0xf]
    %v145 = vld [vmem:[#allocation5 + $0x54] sm:$0xff]
    %v146 = vld [vmem:[#allocation5 + $0x5c] sm:$0xf]
    %v147 = vld [vmem:[#allocation5 + $0x60] sm:$0xff]
    %v148 = vld [vmem:[#allocation5 + $0x68] sm:$0xf]
    %v149 = vld [vmem:[#allocation5 + $0x6c] sm:$0xff]
    %v150 = vld [vmem:[#allocation5 + $0x74] sm:$0xf]
    %v151 = vld [vmem:[#allocation5 + $0x78] sm:$0xff]
    %v152 = vld [vmem:[#allocation5 + $0x80] sm:$0xf]
    %v153 = vld [vmem:[#allocation5 + $0x84] sm:$0xff]
    %v154 = vld [vmem:[#allocation5 + $0x8c] sm:$0xf]
    %v155 = vld [vmem:[#allocation5 + $0x90] sm:$0xff]
    %v156 = vld [vmem:[#allocation5 + $0x98] sm:$0xf]
    %v157 = vld [vmem:[#allocation5 + $0x9c] sm:$0xff]
    %v158 = vld [vmem:[#allocation5 + $0xa4] sm:$0xf]
    %v159 = vld [vmem:[#allocation5 + $0xa8] sm:$0xff]
    %v160 = vld [vmem:[#allocation5 + $0xb0] sm:$0xf]
    %v161 = vld [vmem:[#allocation5 + $0xb4] sm:$0xff]
    %v162 = vld [vmem:[#allocation5 + $0xbc] sm:$0xf]
    %v195 = vunpack.c.l.b16 %v131
    %v196 = vunpack.c.h.b16 %v131
    %v197 = vunpack.c.l.b16 %v132
    %v198 = vunpack.c.l.b16 %v133
    %v199 = vunpack.c.h.b16 %v133
    %v200 = vunpack.c.l.b16 %v134
    %v201 = vunpack.c.l.b16 %v135
    %v202 = vunpack.c.h.b16 %v135
    %v203 = vunpack.c.l.b16 %v136
    %v204 = vunpack.c.l.b16 %v137
    %v205 = vunpack.c.h.b16 %v137
    %v206 = vunpack.c.l.b16 %v138
    %v207 = vunpack.c.l.b16 %v139
    %v208 = vunpack.c.h.b16 %v139
    %v209 = vunpack.c.l.b16 %v140
    %v210 = vunpack.c.l.b16 %v141
    %v211 = vunpack.c.h.b16 %v141
    %v212 = vunpack.c.l.b16 %v142
    %v213 = vunpack.c.l.b16 %v143
    %v214 = vunpack.c.h.b16 %v143
    %v215 = vunpack.c.l.b16 %v144
    %v216 = vunpack.c.l.b16 %v145
    %v217 = vunpack.c.h.b16 %v145
    %v218 = vunpack.c.l.b16 %v146
    %v219 = vunpack.c.l.b16 %v147
    %v220 = vunpack.c.h.b16 %v147
    %v221 = vunpack.c.l.b16 %v148
    %v222 = vunpack.c.l.b16 %v149
    %v223 = vunpack.c.h.b16 %v149
    %v224 = vunpack.c.l.b16 %v150
    %v225 = vunpack.c.l.b16 %v151
    %v226 = vunpack.c.h.b16 %v151
    %v227 = vunpack.c.l.b16 %v152
    %v228 = vunpack.c.l.b16 %v153
    %v229 = vunpack.c.h.b16 %v153
    %v230 = vunpack.c.l.b16 %v154
    %v231 = vunpack.c.l.b16 %v155
    %v232 = vunpack.c.h.b16 %v155
    %v233 = vunpack.c.l.b16 %v156
    %v234 = vunpack.c.l.b16 %v157
    %v235 = vunpack.c.h.b16 %v157
    %v236 = vunpack.c.l.b16 %v158
    %v237 = vunpack.c.l.b16 %v159
    %v238 = vunpack.c.h.b16 %v159
    %v239 = vunpack.c.l.b16 %v160
    %v240 = vunpack.c.l.b16 %v161
    %v241 = vunpack.c.h.b16 %v161
    %v242 = vunpack.c.l.b16 %v162
    %v243 = vpack.c.b16 %v198, %v195
    %v244 = vpack.c.b16 %v199, %v196
    %v245 = vpack.c.b16 %v200, %v197
    %v246 = vpack.c.b16 %v204, %v201
    %v247 = vpack.c.b16 %v205, %v202
    %v248 = vpack.c.b16 %v206, %v203
    %v249 = vpack.c.b16 %v210, %v207
    %v250 = vpack.c.b16 %v211, %v208
    %v251 = vpack.c.b16 %v212, %v209
    %v252 = vpack.c.b16 %v216, %v213
    %v253 = vpack.c.b16 %v217, %v214
    %v254 = vpack.c.b16 %v218, %v215
    %v255 = vpack.c.b16 %v222, %v219
    %v256 = vpack.c.b16 %v223, %v220
    %v257 = vpack.c.b16 %v224, %v221
    %v258 = vpack.c.b16 %v228, %v225
    %v259 = vpack.c.b16 %v229, %v226
    %v260 = vpack.c.b16 %v230, %v227
    %v261 = vpack.c.b16 %v234, %v231
    %v262 = vpack.c.b16 %v235, %v232
    %v263 = vpack.c.b16 %v236, %v233
    %v264 = vpack.c.b16 %v240, %v237
    %v265 = vpack.c.b16 %v241, %v238
    %v266 = vpack.c.b16 %v242, %v239
    %291 = vmatpush.bf16.msra.mxu0 %v264
    %292 = vmatpush.bf16.msra.mxu0 %v261
    %293 = vmatpush.bf16.msra.mxu0 %v258
    %294 = vmatpush.bf16.msra.mxu0 %v255
    %295 = vmatpush.bf16.msra.mxu0 %v252
    %296 = vmatpush.bf16.msra.mxu0 %v249
    %297 = vmatpush.bf16.msra.mxu0 %v246
    %298 = vmatpush.bf16.msra.mxu0 %v243
    %299 = vmatmul.bf16.gmra.mxu0 %v130
    %v300 = vpop.f32.mrf.mxu0
    %v301 = vadd.f32 0.0, %v300
    %v302 = vpop.f32.mrf.mxu0
    %v303 = vadd.f32 0.0, %v302
    %304 = vdwg.mxu0
    %305 = vmatpush.bf16.msra.mxu0 %v265
    %306 = vmatpush.bf16.msra.mxu0 %v262
    %307 = vmatpush.bf16.msra.mxu0 %v259
    %308 = vmatpush.bf16.msra.mxu0 %v256
    %309 = vmatpush.bf16.msra.mxu0 %v253
    %310 = vmatpush.bf16.msra.mxu0 %v250
    %311 = vmatpush.bf16.msra.mxu0 %v247
    %312 = vmatpush.bf16.msra.mxu0 %v244
    %313 = vmatmul.bf16.gmra.mxu0 %v130
    %v314 = vpop.f32.mrf.mxu0
    %v315 = vadd.f32 0.0, %v314
    %v316 = vpop.f32.mrf.mxu0
    %v317 = vadd.f32 0.0, %v316
    %318 = vdwg.mxu0
    %319 = vmatpush.bf16.msra.mxu0 %v266
    %320 = vmatpush.bf16.msra.mxu0 %v263
    %321 = vmatpush.bf16.msra.mxu0 %v260
    %322 = vmatpush.bf16.msra.mxu0 %v257
    %323 = vmatpush.bf16.msra.mxu0 %v254
    %324 = vmatpush.bf16.msra.mxu0 %v251
    %325 = vmatpush.bf16.msra.mxu0 %v248
    %326 = vmatpush.bf16.msra.mxu0 %v245
    %327 = vmatmul.bf16.gmra.mxu0 %v130
    %v328 = vpop.f32.mrf.mxu0
    %v329 = vadd.f32 0.0, %v328
    %v330 = vpop.f32.mrf.mxu0
    %v331 = vadd.f32 0.0, %v330
    %332 = vdwg.mxu0
    %v333 = vrot.slane %v301, 7
    %v334 = vrot.slane %v303, 7
    %vm335 = vcmp.lt.s32.totalorder %v98, 1
    %v336 = vsel %vm335, %v333, %v334
    %v337 = vsel %vm335, %v334, %v333
    %v338 = vsel %vm124, %v337, 0.0
    %v339 = vsel %vm125, %v336, 0.0
    %v340 = vrot.slane %v329, 1
    %v341 = vrot.slane %v331, 1
    %vm342 = vcmp.lt.s32.totalorder %v98, 7
    %v343 = vsel %vm342, %v340, %v341
    %v344 = vsel %vm342, %v341, %v340
    %v345 = vsel %vm126, %v343, 0.0
    %v346 = vsel %vm127, %v344, 0.0
    %v347 = vadd.f32 %v315, %v338
    %v348 = vadd.f32 %v317, %v339
    %v349 = vadd.f32 %v347, %v345
    %v350 = vadd.f32 %v348, %v346
    %v351 = vld [vmem:[#allocation10] sm:$0x1]
    %v352 = vld [vmem:[#allocation10 + $0x1] sm:$0x1]
    %v353 = vadd.f32 %v349, %v350
    %v354 = vrot.slane %v353, 4
    %v355 = vadd.f32 %v353, %v354
    %v356 = vrot.slane %v355, 2
    %v357 = vadd.f32 %v355, %v356
    %v358 = vrot.slane %v357, 1
    %v359 = vadd.f32 %v357, %v358
    %v360 = vmul.f32 %v349, %v349
    %v361 = vmul.f32 %v350, %v350
    %v362 = vadd.f32 %v360, %v361
    %v363 = vrot.slane %v362, 4
    %v364 = vadd.f32 %v362, %v363
    %v365 = vrot.slane %v364, 2
    %v366 = vadd.f32 %v364, %v365
    %v367 = vrot.slane %v366, 1
    %v368 = vadd.f32 %v366, %v367
    %vm369 = vcmask 1040384
    %v370 = vsel %vm369, %v359, %v368
    %v371 = vld [vmem:[#allocation8] sm:$0xff]
    %v372 = vld [vmem:[#allocation8 + $0x8] sm:$0xff]
    %v373 = vld [vmem:[#allocation8 + $0x10] sm:$0xff]
    %v374 = vld [vmem:[#allocation8 + $0x18] sm:$0xff]
    %v375 = vld [vmem:[#allocation8 + $0x20] sm:$0xff]
    %v376 = vld [vmem:[#allocation8 + $0x28] sm:$0xff]
    %v377 = vld [vmem:[#allocation8 + $0x30] sm:$0xff]
    %v378 = vld [vmem:[#allocation8 + $0x38] sm:$0xff]
    %v379 = vld [vmem:[#allocation8 + $0x40] sm:$0xff]
    %v380 = vld [vmem:[#allocation8 + $0x48] sm:$0xff]
    %v381 = vld [vmem:[#allocation8 + $0x50] sm:$0xff]
    %v382 = vld [vmem:[#allocation8 + $0x58] sm:$0xff]
    %v383 = vld [vmem:[#allocation8 + $0x60] sm:$0xff]
    %v384 = vld [vmem:[#allocation8 + $0x68] sm:$0xff]
    %v385 = vld [vmem:[#allocation8 + $0x70] sm:$0xff]
    %v386 = vld [vmem:[#allocation8 + $0x78] sm:$0xff]
    %387 = vmatpush.msra.mxu0 %v386
    %388 = vmatpush.msra.mxu0 %v385
    %389 = vmatpush.msra.mxu0 %v384
    %390 = vmatpush.msra.mxu0 %v383
    %391 = vmatpush.msra.mxu0 %v382
    %392 = vmatpush.msra.mxu0 %v381
    %393 = vmatpush.msra.mxu0 %v380
    %394 = vmatpush.msra.mxu0 %v379
    %395 = vmatpush.msra.mxu0 %v378
    %396 = vmatpush.msra.mxu0 %v377
    %397 = vmatpush.msra.mxu0 %v376
    %398 = vmatpush.msra.mxu0 %v375
    %399 = vmatpush.msra.mxu0 %v374
    %400 = vmatpush.msra.mxu0 %v373
    %401 = vmatpush.msra.mxu0 %v372
    %402 = vmatpush.msra.mxu0 %v371
    %403 = vmatmul.f32.gmra.mxu0 %v370
    %v404 = vpop.f32.mrf.mxu0
    %v405 = vadd.f32 0.0, %v404
    %406 = vdwg.mxu0
    %v407 = vmul.f32 %v405, 0.001953125
    %v408 = vmul.f32 %v407, %v407
    %v410 = vrot.slane %v408, 7
    %v412 = vsub.f32 %v407, %v410
    %v413 = vmax.f32 %v412, 0.0
    %v414 = vadd.f32 %v413, 1e-05
    %v415 = vrsqrt.pop %v414
    %v416 = vmul.f32 %v415, %v414
    %v417 = vmul.f32 %v416, %v415
    %v418 = vmul.f32 0.5, %v417
    %v419 = vsub.f32 1.5, %v418
    %v420 = vmul.f32 %v415, %v419
    %vm421 = vweird.f32 %v414
    %vm422 = vweird.f32 %v415
    %vm423 = vmor %vm421, %vm422
    %v424 = vsel %vm423, %v415, %v420
    %v426 = vrot.slane %v424, 1
    %v428 = vmul.f32 %v351, %v426
    %v429 = vmul.f32 %v407, %v428
    %v430 = vsub.f32 %v352, %v429
    %v431 = vperm.slane %v428, 0
    %v432 = vmul.f32 %v349, %v431
    %v433 = vmul.f32 %v350, %v431
    %v434 = vperm.slane %v430, 0
    %v435 = vadd.f32 %v432, %v434
    %v436 = vadd.f32 %v433, %v434
    %v437 = vmax.f32 %v435, 0.0
    %v438 = vmax.f32 %v436, 0.0
    %v439 = vpack.c.bf16 %v438, %v437
    %v440 = vld [vmem:[#allocation7] sm:$0xff]
    %v441 = vld [vmem:[#allocation7 + $0x8] sm:$0xf]
    %v442 = vld [vmem:[#allocation7 + $0xc] sm:$0xff]
    %v443 = vld [vmem:[#allocation7 + $0x14] sm:$0xf]
    %v444 = vld [vmem:[#allocation7 + $0x18] sm:$0xff]
    %v445 = vld [vmem:[#allocation7 + $0x20] sm:$0xf]
    %v446 = vld [vmem:[#allocation7 + $0x24] sm:$0xff]
    %v447 = vld [vmem:[#allocation7 + $0x2c] sm:$0xf]
    %v448 = vld [vmem:[#allocation7 + $0x30] sm:$0xff]
    %v449 = vld [vmem:[#allocation7 + $0x38] sm:$0xf]
    %v450 = vld [vmem:[#allocation7 + $0x3c] sm:$0xff]
    %v451 = vld [vmem:[#allocation7 + $0x44] sm:$0xf]
    %v452 = vld [vmem:[#allocation7 + $0x48] sm:$0xff]
    %v453 = vld [vmem:[#allocation7 + $0x50] sm:$0xf]
    %v454 = vld [vmem:[#allocation7 + $0x54] sm:$0xff]
    %v455 = vld [vmem:[#allocation7 + $0x5c] sm:$0xf]
    %v456 = vld [vmem:[#allocation7 + $0x60] sm:$0xff]
    %v457 = vld [vmem:[#allocation7 + $0x68] sm:$0xf]
    %v458 = vld [vmem:[#allocation7 + $0x6c] sm:$0xff]
    %v459 = vld [vmem:[#allocation7 + $0x74] sm:$0xf]
    %v460 = vld [vmem:[#allocation7 + $0x78] sm:$0xff]
    %v461 = vld [vmem:[#allocation7 + $0x80] sm:$0xf]
    %v462 = vld [vmem:[#allocation7 + $0x84] sm:$0xff]
    %v463 = vld [vmem:[#allocation7 + $0x8c] sm:$0xf]
    %v464 = vld [vmem:[#allocation7 + $0x90] sm:$0xff]
    %v465 = vld [vmem:[#allocation7 + $0x98] sm:$0xf]
    %v466 = vld [vmem:[#allocation7 + $0x9c] sm:$0xff]
    %v467 = vld [vmem:[#allocation7 + $0xa4] sm:$0xf]
    %v468 = vld [vmem:[#allocation7 + $0xa8] sm:$0xff]
    %v469 = vld [vmem:[#allocation7 + $0xb0] sm:$0xf]
    %v470 = vld [vmem:[#allocation7 + $0xb4] sm:$0xff]
    %v471 = vld [vmem:[#allocation7 + $0xbc] sm:$0xf]
    %v504 = vunpack.c.l.b16 %v440
    %v505 = vunpack.c.h.b16 %v440
    %v506 = vunpack.c.l.b16 %v441
    %v507 = vunpack.c.l.b16 %v442
    %v508 = vunpack.c.h.b16 %v442
    %v509 = vunpack.c.l.b16 %v443
    %v510 = vunpack.c.l.b16 %v444
    %v511 = vunpack.c.h.b16 %v444
    %v512 = vunpack.c.l.b16 %v445
    %v513 = vunpack.c.l.b16 %v446
    %v514 = vunpack.c.h.b16 %v446
    %v515 = vunpack.c.l.b16 %v447
    %v516 = vunpack.c.l.b16 %v448
    %v517 = vunpack.c.h.b16 %v448
    %v518 = vunpack.c.l.b16 %v449
    %v519 = vunpack.c.l.b16 %v450
    %v520 = vunpack.c.h.b16 %v450
    %v521 = vunpack.c.l.b16 %v451
    %v522 = vunpack.c.l.b16 %v452
    %v523 = vunpack.c.h.b16 %v452
    %v524 = vunpack.c.l.b16 %v453
    %v525 = vunpack.c.l.b16 %v454
    %v526 = vunpack.c.h.b16 %v454
    %v527 = vunpack.c.l.b16 %v455
    %v528 = vunpack.c.l.b16 %v456
    %v529 = vunpack.c.h.b16 %v456
    %v530 = vunpack.c.l.b16 %v457
    %v531 = vunpack.c.l.b16 %v458
    %v532 = vunpack.c.h.b16 %v458
    %v533 = vunpack.c.l.b16 %v459
    %v534 = vunpack.c.l.b16 %v460
    %v535 = vunpack.c.h.b16 %v460
    %v536 = vunpack.c.l.b16 %v461
    %v537 = vunpack.c.l.b16 %v462
    %v538 = vunpack.c.h.b16 %v462
    %v539 = vunpack.c.l.b16 %v463
    %v540 = vunpack.c.l.b16 %v464
    %v541 = vunpack.c.h.b16 %v464
    %v542 = vunpack.c.l.b16 %v465
    %v543 = vunpack.c.l.b16 %v466
    %v544 = vunpack.c.h.b16 %v466
    %v545 = vunpack.c.l.b16 %v467
    %v546 = vunpack.c.l.b16 %v468
    %v547 = vunpack.c.h.b16 %v468
    %v548 = vunpack.c.l.b16 %v469
    %v549 = vunpack.c.l.b16 %v470
    %v550 = vunpack.c.h.b16 %v470
    %v551 = vunpack.c.l.b16 %v471
    %v552 = vpack.c.b16 %v507, %v504
    %v553 = vpack.c.b16 %v508, %v505
    %v554 = vpack.c.b16 %v509, %v506
    %v555 = vpack.c.b16 %v513, %v510
    %v556 = vpack.c.b16 %v514, %v511
    %v557 = vpack.c.b16 %v515, %v512
    %v558 = vpack.c.b16 %v519, %v516
    %v559 = vpack.c.b16 %v520, %v517
    %v560 = vpack.c.b16 %v521, %v518
    %v561 = vpack.c.b16 %v525, %v522
    %v562 = vpack.c.b16 %v526, %v523
    %v563 = vpack.c.b16 %v527, %v524
    %v564 = vpack.c.b16 %v531, %v528
    %v565 = vpack.c.b16 %v532, %v529
    %v566 = vpack.c.b16 %v533, %v530
    %v567 = vpack.c.b16 %v537, %v534
    %v568 = vpack.c.b16 %v538, %v535
    %v569 = vpack.c.b16 %v539, %v536
    %v570 = vpack.c.b16 %v543, %v540
    %v571 = vpack.c.b16 %v544, %v541
    %v572 = vpack.c.b16 %v545, %v542
    %v573 = vpack.c.b16 %v549, %v546
    %v574 = vpack.c.b16 %v550, %v547
    %v575 = vpack.c.b16 %v551, %v548
    %600 = vmatpush.bf16.msra.mxu0 %v573
    %601 = vmatpush.bf16.msra.mxu0 %v570
    %602 = vmatpush.bf16.msra.mxu0 %v567
    %603 = vmatpush.bf16.msra.mxu0 %v564
    %604 = vmatpush.bf16.msra.mxu0 %v561
    %605 = vmatpush.bf16.msra.mxu0 %v558
    %606 = vmatpush.bf16.msra.mxu0 %v555
    %607 = vmatpush.bf16.msra.mxu0 %v552
    %608 = vmatmul.bf16.gmra.mxu0 %v439
    %v609 = vpop.f32.mrf.mxu0
    %v610 = vadd.f32 0.0, %v609
    %v611 = vpop.f32.mrf.mxu0
    %v612 = vadd.f32 0.0, %v611
    %613 = vdwg.mxu0
    %614 = vmatpush.bf16.msra.mxu0 %v574
    %615 = vmatpush.bf16.msra.mxu0 %v571
    %616 = vmatpush.bf16.msra.mxu0 %v568
    %617 = vmatpush.bf16.msra.mxu0 %v565
    %618 = vmatpush.bf16.msra.mxu0 %v562
    %619 = vmatpush.bf16.msra.mxu0 %v559
    %620 = vmatpush.bf16.msra.mxu0 %v556
    %621 = vmatpush.bf16.msra.mxu0 %v553
    %622 = vmatmul.bf16.gmra.mxu0 %v439
    %v623 = vpop.f32.mrf.mxu0
    %v624 = vadd.f32 0.0, %v623
    %v625 = vpop.f32.mrf.mxu0
    %v626 = vadd.f32 0.0, %v625
    %627 = vdwg.mxu0
    %628 = vmatpush.bf16.msra.mxu0 %v575
    %629 = vmatpush.bf16.msra.mxu0 %v572
    %630 = vmatpush.bf16.msra.mxu0 %v569
    %631 = vmatpush.bf16.msra.mxu0 %v566
    %632 = vmatpush.bf16.msra.mxu0 %v563
    %633 = vmatpush.bf16.msra.mxu0 %v560
    %634 = vmatpush.bf16.msra.mxu0 %v557
    %635 = vmatpush.bf16.msra.mxu0 %v554
    %636 = vmatmul.bf16.gmra.mxu0 %v439
    %v637 = vpop.f32.mrf.mxu0
    %v638 = vadd.f32 0.0, %v637
    %v639 = vpop.f32.mrf.mxu0
    %v640 = vadd.f32 0.0, %v639
    %641 = vdwg.mxu0
    %v642 = vrot.slane %v610, 7
    %v643 = vrot.slane %v612, 7
    %v644 = vsel %vm335, %v642, %v643
    %v645 = vsel %vm335, %v643, %v642
    %v646 = vsel %vm124, %v645, 0.0
    %v647 = vsel %vm125, %v644, 0.0
    %v648 = vrot.slane %v638, 1
    %v649 = vrot.slane %v640, 1
    %v650 = vsel %vm342, %v648, %v649
    %v651 = vsel %vm342, %v649, %v648
    %v652 = vsel %vm126, %v650, 0.0
    %v653 = vsel %vm127, %v651, 0.0
    %v654 = vadd.f32 %v624, %v646
    %v655 = vadd.f32 %v626, %v647
    %v656 = vadd.f32 %v654, %v652
    %v657 = vadd.f32 %v655, %v653
    %v658 = vld [vmem:[#allocation10 + $0x2] sm:$0x1]
    %v659 = vld [vmem:[#allocation10 + $0x3] sm:$0x1]
    %v660 = vadd.f32 %v656, %v657
    %v661 = vrot.slane %v660, 4
    %v662 = vadd.f32 %v660, %v661
    %v663 = vrot.slane %v662, 2
    %v664 = vadd.f32 %v662, %v663
    %v665 = vrot.slane %v664, 1
    %v666 = vadd.f32 %v664, %v665
    %v667 = vmul.f32 %v656, %v656
    %v668 = vmul.f32 %v657, %v657
    %v669 = vadd.f32 %v667, %v668
    %v670 = vrot.slane %v669, 4
    %v671 = vadd.f32 %v669, %v670
    %v672 = vrot.slane %v671, 2
    %v673 = vadd.f32 %v671, %v672
    %v674 = vrot.slane %v673, 1
    %v675 = vadd.f32 %v673, %v674
    %v676 = vsel %vm369, %v666, %v675
    %677 = vmatpush.msra.mxu0 %v386
    %678 = vmatpush.msra.mxu0 %v385
    %679 = vmatpush.msra.mxu0 %v384
    %680 = vmatpush.msra.mxu0 %v383
    %681 = vmatpush.msra.mxu0 %v382
    %682 = vmatpush.msra.mxu0 %v381
    %683 = vmatpush.msra.mxu0 %v380
    %684 = vmatpush.msra.mxu0 %v379
    %685 = vmatpush.msra.mxu0 %v378
    %686 = vmatpush.msra.mxu0 %v377
    %687 = vmatpush.msra.mxu0 %v376
    %688 = vmatpush.msra.mxu0 %v375
    %689 = vmatpush.msra.mxu0 %v374
    %690 = vmatpush.msra.mxu0 %v373
    %691 = vmatpush.msra.mxu0 %v372
    %692 = vmatpush.msra.mxu0 %v371
    %693 = vmatmul.f32.gmra.mxu0 %v676
    %v694 = vpop.f32.mrf.mxu0
    %v695 = vadd.f32 0.0, %v694
    %696 = vdwg.mxu0
    %v697 = vmul.f32 %v695, 0.001953125
    %v698 = vmul.f32 %v697, %v697
    %v700 = vrot.slane %v698, 7
    %v702 = vsub.f32 %v697, %v700
    %v703 = vmax.f32 %v702, 0.0
    %v704 = vadd.f32 %v703, 1e-05
    %v705 = vrsqrt.pop %v704
    %v706 = vmul.f32 %v705, %v704
    %v707 = vmul.f32 %v706, %v705
    %v708 = vmul.f32 0.5, %v707
    %v709 = vsub.f32 1.5, %v708
    %v710 = vmul.f32 %v705, %v709
    %vm711 = vweird.f32 %v704
    %vm712 = vweird.f32 %v705
    %vm713 = vmor %vm711, %vm712
    %v714 = vsel %vm713, %v705, %v710
    %v716 = vrot.slane %v714, 1
    %v718 = vmul.f32 %v658, %v716
    %v719 = vmul.f32 %v697, %v718
    %v720 = vsub.f32 %v659, %v719
    %v721 = vperm.slane %v718, 0
    %v722 = vmul.f32 %v656, %v721
    %v723 = vmul.f32 %v657, %v721
    %v724 = vperm.slane %v720, 0
    %v725 = vadd.f32 %v722, %v724
    %v726 = vadd.f32 %v723, %v724
    %v727 = vadd.f32 %v725, %v128
    %v728 = vadd.f32 %v726, %v129
    %v729 = vmax.f32 %v727, 0.0
    %v730 = vmax.f32 %v728, 0.0
    %731 = vst [vmem:[#allocation11] sm:$0xff] %v729
    %732 = vst [vmem:[#allocation11 + $0x8] sm:$0xff] %v730
    // Predicated region
    $region42: #{tpu_custom_call.1} parent=1 // pred_check
      _
    $region43: #{tpu_custom_call.1} parent=1 // pred_check_branch
      %734 = sbr.rel (0) target = $region45
    $region44: #{tpu_custom_call.1} parent=1 // pred_region
      %736 = vsyncadd [#allocation4], 0
      %s737 = sshll.u32 [#allocation11], 4
      %s738 = int_to_ptr.vmem [resolvable:$true] %s737
      %s739 = sshll.u32 %s5, 4
      %s740 = int_to_ptr.hbm [resolvable:$true] %s739
      %745 = dma.vmem_to_hbm [thread:$0]  %s738, 256, %s740, [#allocation4], 128, 128, 8
    $region45: #{tpu_custom_call.1} parent=1 // pred_fallthru
      _
    // Predicated region
    $region46: #{tpu_custom_call.1} parent=1 // pred_check
      _
    $region47: #{tpu_custom_call.1} parent=1 // pred_check_branch
      %747 = sbr.rel (0) target = $region49
    $region48: #{tpu_custom_call.1} parent=1 // pred_region
      %749 = dma.done [#allocation4], 256
    $region49: #{tpu_custom_call.1} parent=1 // pred_fallthru
      _
    %750 = vsyncpa [#allocation3], 1
    %751 = vsyncpa [#allocation6], 1
    %752 = vsyncpa [#allocation9], 1
    %753 = vsyncpa [#allocation4], 1

</llo_original>
